<compile_context>
chip_gen: v5e
topology: v5e:2x2
jax: 0.10.0
libtpu: 0.0.40
codegen_flags: <defaults>
</compile_context>

<pallas_src>
import functools

import numpy as np
import jax
import jax.numpy as jnp
from jax.experimental import pallas as pl
from jax.experimental.pallas import tpu as pltpu


def _round_up(n, m):
    return ((n + m - 1) // m) * m


# ----------------------------------------------------------------------------
# Kernel
# ----------------------------------------------------------------------------
def _feature_extractor_kernel(num_cont, num_enum, vocab_offsets, sum_nu, *refs):
    """refs = ([x:(TB,num_cont) f32,] xe:(TB,num_enum) i32,
               table:(num_cont+sum_nu, pad_total) f32, out:(TB, pad_total) f32)."""
    if num_cont > 0:
        x_ref, xe_ref, table_ref, out_ref = refs
    else:
        xe_ref, table_ref, out_ref = refs
    TB = out_ref.shape[0]

    # Single hoisted iota shared by all enum columns (JAX does not CSE broadcasts).
    iota = jax.lax.broadcasted_iota(jnp.int32, (TB, sum_nu), 1)

    # Combined one-hot over the packed vocabulary axis: accumulate as bool,
    # cast to f32 once.  (For sum_nu > 128 one could restrict each compare to
    # the lane blocks covering that column's vocab range; unnecessary here.)
    oh = (xe_ref[:, 0:1] + vocab_offsets[0]) == iota
    for i in range(1, num_enum):                       # static unroll, VPU-only
        oh = jnp.logical_or(oh, (xe_ref[:, i:i + 1] + vocab_offsets[i]) == iota)
    onehot = oh.astype(jnp.float32)

    # LHS = [x | one-hot]  (K = num_cont + sum_nu lanes, register-resident).
    if num_cont > 0:
        lhs = jnp.concatenate([x_ref[...], onehot], axis=1)
    else:
        lhs = onehot

    # One matmul against the identity + block-diagonal table.  The MXU result
    # is the complete lane-padded output row: x copied exactly (x*1 + 0s) and
    # each embedding element is a single 1*w product -> bit-exact in f32.
    out_ref[...] = jnp.dot(lhs, table_ref[...], preferred_element_type=jnp.float32)


# ----------------------------------------------------------------------------
# Init-time packing (call once per module; hoisted off the per-forward path)
# ----------------------------------------------------------------------------
def init_dummy_feature_extractor(num_cont, num_uniqs, emb_sizes, emb_tables):
    num_enum = len(emb_tables)
    total_dim = num_cont + int(sum(emb_sizes))
    pad_total = max(_round_up(max(total_dim, 1), 128), 128)
    sum_nu = int(sum(num_uniqs))
    K = num_cont + sum_nu

    packed = np.zeros((K, pad_total), dtype=np.float32)
    if num_cont > 0:
        packed[:num_cont, :num_cont] = np.eye(num_cont, dtype=np.float32)
    voffs = []
    r, c = 0, num_cont
    for tbl, nu, es in zip(emb_tables, num_uniqs, emb_sizes):
        packed[num_cont + r:num_cont + r + nu, c:c + es] = np.asarray(tbl, np.float32)
        voffs.append(r)
        r += nu
        c += es

    return dict(num_cont=num_cont, num_enum=num_enum,
                vocab_offsets=tuple(voffs), sum_nu=sum_nu,
                total_dim=total_dim, pad_total=pad_total,
                table=jnp.asarray(packed))


# ----------------------------------------------------------------------------
# Batch-tile selection: VMEM-budgeted, >=2 grid steps when the batch allows
# ----------------------------------------------------------------------------
def _choose_batch_tile(B, pad_total, num_cont, num_enum, table_bytes,
                       vmem_budget_bytes=12 << 20, preferred=2048):
    # Double-buffered bytes per row: out (pad_total f32) + x (f32) + xe (i32).
    row_bytes = 2 * 4 * (pad_total + num_cont + num_enum)
    avail = max(vmem_budget_bytes - 2 * table_bytes, 8 * row_bytes)
    tb_cap = max(8, avail // row_bytes)
    b8 = _round_up(B, 8)
    tb = min(preferred, tb_cap, b8)
    # >=2 grid steps so the "parallel" batch axis spans both v7x TensorCores.
    if b8 >= 16 and 2 * tb > b8:
        tb = _round_up(-(-b8 // 2), 8)
    tb = max(8, (int(tb) // 8) * 8)
    return tb


# ----------------------------------------------------------------------------
# Forward
# ----------------------------------------------------------------------------
def dummy_feature_extractor_padded(params, x, xe):
    """Perf-preferred forward: returns (B, pad_total) f32 whose columns
    [:, :total_dim] are the module output (trailing lanes are zero).  Keeping
    the lane-padded width avoids a second full-size HBM copy."""
    num_cont = params["num_cont"]
    num_enum = params["num_enum"]
    pad_total = params["pad_total"]
    sum_nu = params["sum_nu"]
    table = params["table"]

    if num_enum == 0:
        return x.astype(jnp.float32)   # module degenerates to identity on x

    B = xe.shape[0]
    table_bytes = int(table.size) * 4
    TB = _choose_batch_tile(B, pad_total, num_cont, num_enum, table_bytes)
    B_pad = _round_up(B, TB)

    xe = xe.astype(jnp.int32)
    if num_cont > 0:
        x = x.astype(jnp.float32)
    if B_pad != B:
        # Pad rows use index 0 (valid) and are sliced off below.
        xe = jnp.pad(xe, ((0, B_pad - B), (0, 0)))
        if num_cont > 0:
            x = jnp.pad(x, ((0, B_pad - B), (0, 0)))

    kernel = functools.partial(_feature_extractor_kernel, num_cont, num_enum,
                               params["vocab_offsets"], sum_nu)

    in_specs = []
    operands = []
    if num_cont > 0:
        in_specs.append(pl.BlockSpec((TB, num_cont), lambda b: (b, 0)))
        operands.append(x)
    in_specs.append(pl.BlockSpec((TB, num_enum), lambda b: (b, 0)))
    operands.append(xe)
    # Resident packed table (constant index_map; ~K*pad_total*4 bytes, tiny).
    in_specs.append(pl.BlockSpec(table.shape, lambda b: (0, 0)))
    operands.append(table)

    out = pl.pallas_call(
        kernel,
        out_shape=jax.ShapeDtypeStruct((B_pad, pad_total), jnp.float32),
        grid_spec=pltpu.PrefetchScalarGridSpec(
            num_scalar_prefetch=0,
            grid=(B_pad // TB,),
            in_specs=in_specs,
            out_specs=pl.BlockSpec((TB, pad_total), lambda b: (b, 0)),
        ),
        compiler_params=pltpu.CompilerParams(
            dimension_semantics=("parallel",)),
    )(*operands)

    if B_pad != B:
        out = out[:B]          # slice rows only when batch padding was added
    return out


def dummy_feature_extractor(params, x, xe):
    """Exact module semantics: (B, total_dim).  Note: the lane slice forces an
    extra copy; perf-critical callers should use dummy_feature_extractor_padded
    and index [:, :total_dim] downstream (or fuse)."""
    out = dummy_feature_extractor_padded(params, x, xe)
    if params["num_enum"] == 0:
        return out
    return out[:, :params["total_dim"]]


# ----------------------------------------------------------------------------
# Pure-JAX reference
# ----------------------------------------------------------------------------
def reference(x, xe, emb_tables, num_cont, emb_sizes):
    parts = []
    if num_cont > 0:
        parts.append(x.astype(jnp.float32))
    for i, tbl in enumerate(emb_tables):
        parts.append(jnp.take(jnp.asarray(tbl, jnp.float32), xe[:, i], axis=0))
    return jnp.concatenate(parts, axis=1)


if __name__ == "__main__":
    # Module config consistent with DummyFeatureExtractor.__init__:
    #   num_cont=4, num_enum=3, num_uniqs=[5, 7, 11]
    #   HEBO default emb_sizes = [min(50, 1 + v // 2) for v in num_uniqs] = [3, 4, 6]
    num_cont = 4
    num_uniqs = [5, 7, 11]
    num_enum = len(num_uniqs)
    emb_sizes = [min(50, 1 + v // 2) for v in num_uniqs]
    B = 8

    key = jax.random.PRNGKey(0)
    k_x, k_xe, *k_tbls = jax.random.split(key, 2 + num_enum)

    x = jax.random.normal(k_x, (B, num_cont), dtype=jnp.float32)
    xe = jnp.stack(
        [jax.random.randint(jax.random.fold_in(k_xe, i), (B,), 0, num_uniqs[i])
         for i in range(num_enum)], axis=1).astype(jnp.int32)

    # nn.Embedding default init ~ N(0, 1), deterministic via PRNGKey(0) splits.
    emb_tables = [
        jax.random.normal(k_tbls[i], (num_uniqs[i], emb_sizes[i]), dtype=jnp.float32)
        for i in range(num_enum)
    ]

    # Init-time packing: once per module, not per forward call.
    params = init_dummy_feature_extractor(num_cont, num_uniqs, emb_sizes, emb_tables)

    # Perf-preferred padded output; module output is columns [:, :total_dim].
    out_padded = jax.block_until_ready(dummy_feature_extractor_padded(params, x, xe))

    total_dim = num_cont + sum(emb_sizes)
    out = out_padded[:, :total_dim]
    ref = reference(x, xe, emb_tables, num_cont, emb_sizes)

    assert out_padded.shape == (B, params["pad_total"])
    assert out.shape == (B, total_dim)
    assert jnp.allclose(out, ref, atol=1e-6), "mismatch vs pure-JAX reference"
    assert jnp.all(out_padded[:, total_dim:] == 0.0), "padded lanes must be zero"

    print("KERNEL_OK")
</pallas_src>

<mosaic_0001>
module attributes {stable_mosaic.version = 11 : i64} {
  func.func @_feature_extractor_kernel(%arg0: i32, %arg1: memref<8x4xf32, #tpu.memory_space<vmem>>, %arg2: memref<8x3xi32, #tpu.memory_space<vmem>>, %arg3: memref<27x128xf32, #tpu.memory_space<vmem>>, %arg4: memref<8x128xf32, #tpu.memory_space<vmem>>) attributes {dimension_semantics = [#tpu.dimension_semantics<parallel>], iteration_bounds = array<i64: 1>, scalar_prefetch = 0 : i64, scratch_operands = 0 : i64, tpu.core_type = #tpu.core_type<tc>, window_params = [{transform_indices = @transform_0, window_bounds = array<i64: 8, 4>}, {transform_indices = @transform_1, window_bounds = array<i64: 8, 3>}, {pipeline_mode = #tpu.pipeline_mode<synchronous>, transform_indices = @transform_2, window_bounds = array<i64: 27, 128>}, {transform_indices = @transform_3, window_bounds = array<i64: 8, 128>}]} {
    %0 = tpu.iota {dimensions = array<i32: 1>} : vector<8x23xi32>
    %c0 = arith.constant 0 : index
    %c0_0 = arith.constant 0 : index
    %1 = vector.load %arg2[%c0, %c0_0] : memref<8x3xi32, #tpu.memory_space<vmem>>, vector<8x1xi32>
    %c0_i32 = arith.constant 0 : i32
    %2 = vector.broadcast %c0_i32 : i32 to vector<8x1xi32>
    %3 = arith.addi %1, %2 : vector<8x1xi32>
    %4 = vector.broadcast %3 : vector<8x1xi32> to vector<8x23xi32>
    %5 = arith.cmpi eq, %4, %0 : vector<8x23xi32>
    %c0_1 = arith.constant 0 : index
    %c1 = arith.constant 1 : index
    %6 = vector.load %arg2[%c0_1, %c1] : memref<8x3xi32, #tpu.memory_space<vmem>>, vector<8x1xi32>
    %c5_i32 = arith.constant 5 : i32
    %7 = vector.broadcast %c5_i32 : i32 to vector<8x1xi32>
    %8 = arith.addi %6, %7 : vector<8x1xi32>
    %9 = vector.broadcast %8 : vector<8x1xi32> to vector<8x23xi32>
    %10 = arith.cmpi eq, %9, %0 : vector<8x23xi32>
    %11 = arith.ori %5, %10 : vector<8x23xi1>
    %c0_2 = arith.constant 0 : index
    %c2 = arith.constant 2 : index
    %12 = vector.load %arg2[%c0_2, %c2] : memref<8x3xi32, #tpu.memory_space<vmem>>, vector<8x1xi32>
    %c12_i32 = arith.constant 12 : i32
    %13 = vector.broadcast %c12_i32 : i32 to vector<8x1xi32>
    %14 = arith.addi %12, %13 : vector<8x1xi32>
    %15 = vector.broadcast %14 : vector<8x1xi32> to vector<8x23xi32>
    %16 = arith.cmpi eq, %15, %0 : vector<8x23xi32>
    %17 = arith.ori %11, %16 : vector<8x23xi1>
    %18 = arith.extui %17 : vector<8x23xi1> to vector<8x23xi32>
    %19 = arith.sitofp %18 : vector<8x23xi32> to vector<8x23xf32>
    %c0_3 = arith.constant 0 : index
    %c0_4 = arith.constant 0 : index
    %20 = vector.load %arg1[%c0_3, %c0_4] : memref<8x4xf32, #tpu.memory_space<vmem>>, vector<8x4xf32>
    %21 = tpu.concatenate %20, %19 in 1 : vector<8x4xf32>, vector<8x23xf32> -> vector<8x27xf32>
    %c0_5 = arith.constant 0 : index
    %c0_6 = arith.constant 0 : index
    %22 = vector.load %arg3[%c0_5, %c0_6] : memref<27x128xf32, #tpu.memory_space<vmem>>, vector<27x128xf32>
    %cst = arith.constant dense<0.000000e+00> : vector<8x128xf32>
    %23 = tpu.matmul %21, %22, %cst {dimension_numbers = #tpu.dot_dimension_numbers<[1], [0], [0], [1], [0, 0, 1, 1], [], []>} : vector<8x27xf32>, vector<27x128xf32>, vector<8x128xf32> -> vector<8x128xf32>
    %c0_7 = arith.constant 0 : index
    %c0_8 = arith.constant 0 : index
    %24 = vector.load %arg4[%c0_7, %c0_8] : memref<8x128xf32, #tpu.memory_space<vmem>>, vector<8x128xf32>
    tpu.vector_store %arg4[%c0_7, %c0_8], %23 {strides = array<i32>} : memref<8x128xf32, #tpu.memory_space<vmem>>, vector<8x128xf32>,
    return
  }
  func.func @transform_0(%arg0: i32) -> (i32, i32) {
    %c0_i32 = arith.constant 0 : i32
    %c0_i32_0 = arith.constant 0 : i32
    return %arg0, %c0_i32 : i32, i32
  }
  func.func @transform_1(%arg0: i32) -> (i32, i32) {
    %c0_i32 = arith.constant 0 : i32
    %c0_i32_0 = arith.constant 0 : i32
    return %arg0, %c0_i32 : i32, i32
  }
  func.func @transform_2(%arg0: i32) -> (i32, i32) {
    %c0_i32 = arith.constant 0 : i32
    %c0_i32_0 = arith.constant 0 : i32
    %c0_i32_1 = arith.constant 0 : i32
    return %c0_i32, %c0_i32_0 : i32, i32
  }
  func.func @transform_3(%arg0: i32) -> (i32, i32) {
    %c0_i32 = arith.constant 0 : i32
    %c0_i32_0 = arith.constant 0 : i32
    return %arg0, %c0_i32 : i32, i32
  }
}

</mosaic_0001>

<llo_original>
// kernel: tpu_custom_call.1
$region0: #{tpu_custom_call.1}
  #allocation0 [shape = 'u32[]', space=smem, size = 0x4, offset = 0x4, fixed_abs, tag = 'smem constant byte address 0x4 - core index']
  #allocation1 [shape = 'u32[72,128]{1,0:T(1,128)}', space=vmem, size = 0x9000, scoped, tag = 'internal scratch']
  %s0 = inlined_call_operand.vmem [shape: f32[8,4], index: 0, kind: input, shape index: {}]
  %s1 = inlined_call_operand.vmem [shape: s32[8,3], index: 1, kind: input, shape index: {}]
  %s2 = inlined_call_operand.hbm [shape: f32[27,128], index: 2, kind: input, shape index: {}]
  %s3 = inlined_call_operand.hbm [shape: f32[8,128], index: 3, kind: output, shape index: {}]
  %s4 = sld [smem:[#allocation0]]
  $region26: #{tpu_custom_call.1} parent=0
    _
  %s6 = ssub.s32 1, %s4
  %s7 = scalar_select 0, %s6, %s4
  $region1: #{tpu_custom_call.1} parent=0
    #allocation2 [shape = 'u8[16384]{0}', space=vmem, size = 0x4000, scoped, tag = 'input window, operand 2, single buffered']
    #allocation3 [shape = 's32[1]{0}', space=sflag, size = 0x4, scoped, tag = 'scoped memory for tpu_custom_call.1']
    #allocation4 [shape = 's32[1]{0}', space=sflag, size = 0x4, scoped, tag = 'scoped memory for tpu_custom_call.1']
    #allocation5 [shape = 'u8[4096]{0}', space=vmem, size = 0x1000, scoped, tag = 'output window, operand 0, single buffered']
    %8 = vsyncpa [#allocation3], 0
    %9 = vsyncpa [#allocation4], 0
    // Predicated region
    $region2: #{tpu_custom_call.1} parent=1 // pred_check
      _
    $region3: #{tpu_custom_call.1} parent=1 // pred_check_branch
      %11 = sbr.rel (0) target = $region5
    $region4: #{tpu_custom_call.1} parent=1 // pred_region
      _
    $region5: #{tpu_custom_call.1} parent=1 // pred_fallthru
      _
    // Predicated region
    $region6: #{tpu_custom_call.1} parent=1 // pred_check
      _
    $region7: #{tpu_custom_call.1} parent=1 // pred_check_branch
      %13 = sbr.rel (0) target = $region9
    $region8: #{tpu_custom_call.1} parent=1 // pred_region
      _
    $region9: #{tpu_custom_call.1} parent=1 // pred_fallthru
      _
    // Predicated region
    $region10: #{tpu_custom_call.1} parent=1 // pred_check
      _
    $region11: #{tpu_custom_call.1} parent=1 // pred_check_branch
      %15 = sbr.rel (0) target = $region13
    $region12: #{tpu_custom_call.1} parent=1 // pred_region
      %17 = vsyncadd [#allocation3], 0
      %s18 = sshll.u32 %s2, 4
      %s19 = int_to_ptr.hbm [resolvable:$true] %s18
      %s20 = sshll.u32 [#allocation2], 4
      %s21 = int_to_ptr.vmem [resolvable:$true] %s20
      %26 = dma.hbm_to_vmem [thread:$0]  %s19, 512, %s21, [#allocation3], 128, 128, 8
    $region13: #{tpu_custom_call.1} parent=1 // pred_fallthru
      _
    // Predicated region
    $region14: #{tpu_custom_call.1} parent=1 // pred_check
      _
    $region15: #{tpu_custom_call.1} parent=1 // pred_check_branch
      %28 = sbr.rel (0) target = $region17
    $region16: #{tpu_custom_call.1} parent=1 // pred_region
      %30 = dma.done [#allocation3], 512
    $region17: #{tpu_custom_call.1} parent=1 // pred_fallthru
      _
    %v31 = vlaneseq
    %v32 = vand.u32 %v31, 127
    %v33 = vld [vmem:[%s1] sm:$0xff]
    %34 = vset.pattern.permute.xlu0 0
    %35 = vperm.xlu0 %34, %v33
    %v36 = vpop.permute.xlu0 %35
    %vm37 = vcmp.eq.s32.totalorder %v36, %v32
    %v38 = vadd.s32 %v33, 5
    %39 = vset.pattern.permute.xlu0 1
    %40 = vperm.xlu0 %39, %v38
    %v41 = vpop.permute.xlu0 %40
    %vm42 = vcmp.eq.s32.totalorder %v41, %v32
    %vm43 = vmor %vm37, %vm42
    %v44 = vadd.s32 %v33, 12
    %45 = vset.pattern.permute.xlu0 2
    %46 = vperm.xlu0 %45, %v44
    %v47 = vpop.permute.xlu0 %46
    %vm48 = vcmp.eq.s32.totalorder %v47, %v32
    %vm49 = vmor %vm43, %vm48
    %v50 = vsel %vm49, 1, 0
    %v51 = vcvt.s32.f32 %v50
    %v52 = vld [vmem:[%s0] sm:$0xff]
    %54 = vrot.lane.b32.xlu0 %v51, 4
    %v55 = vpop.permute.xlu0 %54
    %vm57 = vcmask 31744
    %v58 = vsel %vm57, %v52, %v55
    %v59 = vld [vmem:[#allocation2] sm:$0xff]
    %v60 = vld [vmem:[#allocation2 + $0x8] sm:$0xff]
    %v61 = vld [vmem:[#allocation2 + $0x10] sm:$0xff]
    %v62 = vld [vmem:[#allocation2 + $0x18] sm:$0x7]
    %vm63 = vcmask 220160
    %v65 = vsel %vm63, %v58, 0
    %vm67 = vcmask 1042432
    %v69 = vsel %vm67, %v62, 0
    %71 = vmatpush.msra.mxu0 0.0
    %72 = vmatpush.msra.mxu0 0.0
    %73 = vmatpush.msra.mxu0 0.0
    %74 = vmatpush.msra.mxu0 0.0
    %75 = vmatpush.msra.mxu0 0.0
    %76 = vmatpush.msra.mxu0 0.0
    %77 = vmatpush.msra.mxu0 0.0
    %78 = vmatpush.msra.mxu0 0.0
    %79 = vmatpush.msra.mxu0 0.0
    %80 = vmatpush.msra.mxu0 0.0
    %81 = vmatpush.msra.mxu0 0.0
    %82 = vmatpush.msra.mxu0 0.0
    %83 = vmatpush.msra.mxu0 %v69
    %84 = vmatpush.msra.mxu0 %v61
    %85 = vmatpush.msra.mxu0 %v60
    %86 = vmatpush.msra.mxu0 %v59
    %87 = vmatmul.f32.gmra.mxu0 %v65
    %v88 = vpop.f32.mrf.mxu0
    %v89 = vadd.f32 0.0, %v88
    %90 = vdwg.mxu0
    %91 = vst [vmem:[#allocation5] sm:$0xff] %v89
    // Predicated region
    $region18: #{tpu_custom_call.1} parent=1 // pred_check
      _
    $region19: #{tpu_custom_call.1} parent=1 // pred_check_branch
      %93 = sbr.rel (0) target = $region21
    $region20: #{tpu_custom_call.1} parent=1 // pred_region
      %95 = vsyncadd [#allocation4], 0
      %s97 = sshll.u32 [#allocation5], 4
      %s98 = int_to_ptr.vmem [resolvable:$true] %s97
      %s99 = sshll.u32 %s3, 4
      %s100 = int_to_ptr.hbm [resolvable:$true] %s99
      %102 = dma.vmem_to_hbm [thread:$0]  %s98, 128, %s100, [#allocation4]
    $region21: #{tpu_custom_call.1} parent=1 // pred_fallthru
      _
    // Predicated region
    $region22: #{tpu_custom_call.1} parent=1 // pred_check
      _
    $region23: #{tpu_custom_call.1} parent=1 // pred_check_branch
      %104 = sbr.rel (0) target = $region25
    $region24: #{tpu_custom_call.1} parent=1 // pred_region
      %106 = dma.done [#allocation4], 128
    $region25: #{tpu_custom_call.1} parent=1 // pred_fallthru
      _
    %107 = vsyncpa [#allocation3], 1
    %108 = vsyncpa [#allocation4], 1

</llo_original>
